<compile_context>
chip_gen: v6e
topology: v6e:2x2x1
jax: 0.10.0
libtpu: 0.0.40
codegen_flags: <defaults>
</compile_context>

<pallas_src>
import functools

import jax
import jax.numpy as jnp
from jax.experimental import pallas as pl
from jax.experimental.pallas import tpu as pltpu


# ----------------------------------------------------------------------------
# Phase 1: squeeze (spatial mean) + excite (fc1 -> relu -> fc2 -> sigmoid)
# ----------------------------------------------------------------------------
def se_squeeze_excite_kernel(x_ref, w1t_ref, w2t_ref, scale_ref, acc_ref, *,
                             inv_hw):
    # x_ref   : (B, C, hw_tile)  current lane-dense HW tile (all batches)
    # w1t_ref : (C, Cr)          fc1 weight, pre-transposed in the wrapper
    # w2t_ref : (Cr, C)          fc2 weight, pre-transposed in the wrapper
    # scale_ref: (B, C)          per-(batch, channel) gate (output)
    # acc_ref : (B, C) f32       running spatial sum (VMEM scratch)
    t = pl.program_id(0)

    @pl.when(t == 0)
    def _():
        acc_ref[...] = jnp.zeros_like(acc_ref)

    # Partial spatial sum for this HW tile; accumulate in f32 without
    # materializing an upcast copy of the whole tile.
    acc_ref[...] += jnp.sum(x_ref[...], axis=2, dtype=jnp.float32)

    @pl.when(t == pl.num_programs(0) - 1)
    def _():
        mean = acc_ref[...] * inv_hw                                  # (B, C)
        y1 = jnp.dot(mean, w1t_ref[...].astype(jnp.float32),
                     preferred_element_type=jnp.float32)              # (B, Cr)
        y1 = jnp.maximum(y1, 0.0)
        y2 = jnp.dot(y1, w2t_ref[...].astype(jnp.float32),
                     preferred_element_type=jnp.float32)              # (B, C)
        scale_ref[...] = jax.nn.sigmoid(y2).astype(scale_ref.dtype)


# ----------------------------------------------------------------------------
# Phase 2: broadcasted channel-wise rescale of x
# ----------------------------------------------------------------------------
def se_scale_kernel(x_ref, scale_ref, o_ref):
    # x_ref    : (1, C, hw_tile)
    # scale_ref: (1, C, 1)
    # o_ref    : (1, C, hw_tile)
    # Straight read-multiply-write in x's dtype (no f32 tile copy).
    o_ref[0, :, :] = (x_ref[0, :, :] * scale_ref[0, :, :]).astype(o_ref.dtype)


def _pick_hw_tile(hw_pad, bytes_per_hw_lane, budget_bytes):
    """Largest multiple of 128 that divides hw_pad and (double-buffered) fits
    the VMEM budget."""
    max_lanes = max(128, budget_bytes // max(1, 2 * bytes_per_hw_lane))
    units = hw_pad // 128
    best = 128
    for d in range(1, units + 1):
        if units % d == 0 and d * 128 <= max_lanes:
            best = d * 128
    return best


def se_block(x, w1, w2):
    """x: (B, C, H, W); w1: (C//r, C); w2: (C, C//r). Matches PyTorch SEBlock."""
    B, C, H, W = x.shape
    HW = H * W
    Cr = w1.shape[0]

    # Lane-dense layout: pad HW up to a multiple of 128 (zeros don't bias the
    # mean because we divide by the true HW; padded output lanes are sliced
    # off below).
    HW_pad = ((HW + 127) // 128) * 128
    x_flat = x.reshape(B, C, HW)
    if HW_pad != HW:
        x_flat = jnp.pad(x_flat, ((0, 0), (0, 0), (0, HW_pad - HW)))

    # Pre-transpose the tiny weights once so the in-kernel gate is a plain
    # row-major batched matmul (no in-kernel transposes through the XLU).
    w1t = w1.T  # (C, Cr)
    w2t = w2.T  # (Cr, C)

    itemsize = jnp.dtype(x.dtype).itemsize
    vmem_budget = 8 * 1024 * 1024  # per-step x(+out) footprint target, v7x-safe

    # ---- Phase 1: per-(batch, channel) gate ---------------------------------
    hw_tile_sq = _pick_hw_tile(HW_pad, B * C * itemsize, vmem_budget)
    n_sq = HW_pad // hw_tile_sq

    scale = pl.pallas_call(
        functools.partial(se_squeeze_excite_kernel, inv_hw=1.0 / HW),
        out_shape=jax.ShapeDtypeStruct((B, C), x.dtype),
        grid_spec=pltpu.PrefetchScalarGridSpec(
            num_scalar_prefetch=0,
            grid=(n_sq,),
            in_specs=[
                pl.BlockSpec((B, C, hw_tile_sq), lambda t: (0, 0, t)),
                # Constant index_maps -> weights stay resident in VMEM.
                pl.BlockSpec((C, Cr), lambda t: (0, 0)),
                pl.BlockSpec((Cr, C), lambda t: (0, 0)),
            ],
            out_specs=pl.BlockSpec((B, C), lambda t: (0, 0)),
            scratch_shapes=[pltpu.VMEM((B, C), jnp.float32)],
        ),
        compiler_params=pltpu.CompilerParams(
            dimension_semantics=("arbitrary",)),
    )(x_flat, w1t, w2t)

    scale3 = scale.reshape(B, C, 1)

    # ---- Phase 2: elementwise rescale, deep 2-D parallel pipeline -----------
    hw_tile_sc = _pick_hw_tile(HW_pad, 2 * C * itemsize, vmem_budget)
    n_sc = HW_pad // hw_tile_sc

    out_flat = pl.pallas_call(
        se_scale_kernel,
        out_shape=jax.ShapeDtypeStruct((B, C, HW_pad), x.dtype),
        grid_spec=pltpu.PrefetchScalarGridSpec(
            num_scalar_prefetch=0,
            grid=(B, n_sc),
            in_specs=[
                pl.BlockSpec((1, C, hw_tile_sc), lambda b, t: (b, 0, t)),
                pl.BlockSpec((1, C, 1), lambda b, t: (b, 0, 0)),
            ],
            out_specs=pl.BlockSpec((1, C, hw_tile_sc), lambda b, t: (b, 0, t)),
        ),
        compiler_params=pltpu.CompilerParams(
            dimension_semantics=("parallel", "parallel")),
    )(x_flat, scale3)

    if HW_pad != HW:
        out_flat = out_flat[:, :, :HW]
    return out_flat.reshape(B, C, H, W)


def se_block_ref(x, w1, w2):
    """Pure-JAX reference matching the PyTorch forward."""
    B, C, H, W = x.shape
    y = x.reshape(B, C, -1).mean(axis=2)          # (B, C)
    y = y @ w1.T                                  # (B, C//r)
    y = jnp.maximum(y, 0.0)
    y = y @ w2.T                                  # (B, C)
    y = jax.nn.sigmoid(y).reshape(B, C, 1, 1)
    return x * y


if __name__ == "__main__":
    key = jax.random.PRNGKey(0)
    B, C, H, W = 2, 32, 16, 16
    reduction = 16
    Cr = C // reduction

    kx, k1, k2 = jax.random.split(key, 3)
    x = jax.random.normal(kx, (B, C, H, W), dtype=jnp.float32)
    # Deterministic synthetic weights (shapes from nn.Linear(..., bias=False)).
    w1 = jax.random.normal(k1, (Cr, C), dtype=jnp.float32) * 0.1   # fc1: (C//r, C)
    w2 = jax.random.normal(k2, (C, Cr), dtype=jnp.float32) * 0.1   # fc2: (C, C//r)

    out = se_block(x, w1, w2)
    out = jax.block_until_ready(out)

    ref = se_block_ref(x, w1, w2)
    assert out.shape == (B, C, H, W)
    assert jnp.allclose(out, ref, atol=1e-5, rtol=1e-5), "mismatch vs reference"

    print("KERNEL_OK")
</pallas_src>

<mosaic_0001>
module attributes {stable_mosaic.version = 11 : i64} {
  func.func @se_squeeze_excite_kernel(%arg0: i32, %arg1: memref<2x32x256xf32, #tpu.memory_space<vmem>>, %arg2: memref<32x2xf32, #tpu.memory_space<vmem>>, %arg3: memref<2x32xf32, #tpu.memory_space<vmem>>, %arg4: memref<2x32xf32, #tpu.memory_space<vmem>>, %arg5: memref<2x32xf32, #tpu.memory_space<vmem>>) attributes {dimension_semantics = [#tpu.dimension_semantics<arbitrary>], iteration_bounds = array<i64: 1>, scalar_prefetch = 0 : i64, scratch_operands = 1 : i64, tpu.core_type = #tpu.core_type<tc>, window_params = [{transform_indices = @transform_0, window_bounds = array<i64: 2, 32, 256>}, {pipeline_mode = #tpu.pipeline_mode<synchronous>, transform_indices = @transform_1, window_bounds = array<i64: 32, 2>}, {pipeline_mode = #tpu.pipeline_mode<synchronous>, transform_indices = @transform_2, window_bounds = array<i64: 2, 32>}, {pipeline_mode = #tpu.pipeline_mode<synchronous>, transform_indices = @transform_3, window_bounds = array<i64: 2, 32>}]} {
    %c0_i32 = arith.constant 0 : i32
    %0 = arith.cmpi eq, %arg0, %c0_i32 : i32
    %1 = arith.extui %0 : i1 to i32
    %c0_i32_0 = arith.constant 0 : i32
    %2 = arith.cmpi ne, %1, %c0_i32_0 : i32
    scf.if %2 {
      %cst_9 = arith.constant 0.000000e+00 : f32
      %11 = vector.broadcast %cst_9 : f32 to vector<2x32xf32>
      %c0_10 = arith.constant 0 : index
      %c0_11 = arith.constant 0 : index
      %12 = vector.load %arg5[%c0_10, %c0_11] : memref<2x32xf32, #tpu.memory_space<vmem>>, vector<2x32xf32>
      tpu.vector_store %arg5[%c0_10, %c0_11], %11 {strides = array<i32>} : memref<2x32xf32, #tpu.memory_space<vmem>>, vector<2x32xf32>,
    } else {
    }
    %c0 = arith.constant 0 : index
    %c0_1 = arith.constant 0 : index
    %3 = vector.load %arg5[%c0, %c0_1] : memref<2x32xf32, #tpu.memory_space<vmem>>, vector<2x32xf32>
    %c0_2 = arith.constant 0 : index
    %c0_3 = arith.constant 0 : index
    %c0_4 = arith.constant 0 : index
    %4 = vector.load %arg1[%c0_2, %c0_3, %c0_4] : memref<2x32x256xf32, #tpu.memory_space<vmem>>, vector<2x32x256xf32>
    %cst = arith.constant dense<0.000000e+00> : vector<2x32xf32>
    %5 = vector.multi_reduction <add>, %4, %cst [2] : vector<2x32x256xf32> to vector<2x32xf32>
    %6 = arith.addf %3, %5 : vector<2x32xf32>
    %c0_5 = arith.constant 0 : index
    %c0_6 = arith.constant 0 : index
    %7 = vector.load %arg5[%c0_5, %c0_6] : memref<2x32xf32, #tpu.memory_space<vmem>>, vector<2x32xf32>
    tpu.vector_store %arg5[%c0_5, %c0_6], %6 {strides = array<i32>} : memref<2x32xf32, #tpu.memory_space<vmem>>, vector<2x32xf32>,
    %c0_i32_7 = arith.constant 0 : i32
    %8 = arith.cmpi eq, %arg0, %c0_i32_7 : i32
    %9 = arith.extui %8 : i1 to i32
    %c0_i32_8 = arith.constant 0 : i32
    %10 = arith.cmpi ne, %9, %c0_i32_8 : i32
    scf.if %10 {
      %c0_9 = arith.constant 0 : index
      %c0_10 = arith.constant 0 : index
      %11 = vector.load %arg5[%c0_9, %c0_10] : memref<2x32xf32, #tpu.memory_space<vmem>>, vector<2x32xf32>
      %cst_11 = arith.constant 3.906250e-03 : f32
      %12 = vector.broadcast %cst_11 : f32 to vector<2x32xf32>
      %13 = arith.mulf %11, %12 : vector<2x32xf32>
      %c0_12 = arith.constant 0 : index
      %c0_13 = arith.constant 0 : index
      %14 = vector.load %arg2[%c0_12, %c0_13] : memref<32x2xf32, #tpu.memory_space<vmem>>, vector<32x2xf32>
      %cst_14 = arith.constant dense<0.000000e+00> : vector<2x2xf32>
      %15 = tpu.matmul %13, %14, %cst_14 {dimension_numbers = #tpu.dot_dimension_numbers<[1], [0], [0], [1], [0, 0, 1, 1], [], []>} : vector<2x32xf32>, vector<32x2xf32>, vector<2x2xf32> -> vector<2x2xf32>
      %cst_15 = arith.constant 0.000000e+00 : f32
      %16 = vector.broadcast %cst_15 : f32 to vector<2x2xf32>
      %17 = arith.maximumf %15, %16 : vector<2x2xf32>
      %c0_16 = arith.constant 0 : index
      %c0_17 = arith.constant 0 : index
      %18 = vector.load %arg3[%c0_16, %c0_17] : memref<2x32xf32, #tpu.memory_space<vmem>>, vector<2x32xf32>
      %cst_18 = arith.constant dense<0.000000e+00> : vector<2x32xf32>
      %19 = tpu.matmul %17, %18, %cst_18 {dimension_numbers = #tpu.dot_dimension_numbers<[1], [0], [0], [1], [0, 0, 1, 1], [], []>} : vector<2x2xf32>, vector<2x32xf32>, vector<2x32xf32> -> vector<2x32xf32>
      %20 = arith.negf %19 : vector<2x32xf32>
      %21 = math.exp %20 : vector<2x32xf32>
      %cst_19 = arith.constant 1.000000e+00 : f32
      %22 = vector.broadcast %cst_19 : f32 to vector<2x32xf32>
      %23 = arith.addf %22, %21 : vector<2x32xf32>
      %24 = arith.divf %22, %23 : vector<2x32xf32>
      %c0_20 = arith.constant 0 : index
      %c0_21 = arith.constant 0 : index
      %25 = vector.load %arg4[%c0_20, %c0_21] : memref<2x32xf32, #tpu.memory_space<vmem>>, vector<2x32xf32>
      tpu.vector_store %arg4[%c0_20, %c0_21], %24 {strides = array<i32>} : memref<2x32xf32, #tpu.memory_space<vmem>>, vector<2x32xf32>,
    } else {
    }
    return
  }
  func.func @transform_0(%arg0: i32) -> (i32, i32, i32) {
    %c0_i32 = arith.constant 0 : i32
    %c0_i32_0 = arith.constant 0 : i32
    %c0_i32_1 = arith.constant 0 : i32
    return %c0_i32, %c0_i32_0, %arg0 : i32, i32, i32
  }
  func.func @transform_1(%arg0: i32) -> (i32, i32) {
    %c0_i32 = arith.constant 0 : i32
    %c0_i32_0 = arith.constant 0 : i32
    %c0_i32_1 = arith.constant 0 : i32
    return %c0_i32, %c0_i32_0 : i32, i32
  }
  func.func @transform_2(%arg0: i32) -> (i32, i32) {
    %c0_i32 = arith.constant 0 : i32
    %c0_i32_0 = arith.constant 0 : i32
    %c0_i32_1 = arith.constant 0 : i32
    return %c0_i32, %c0_i32_0 : i32, i32
  }
  func.func @transform_3(%arg0: i32) -> (i32, i32) {
    %c0_i32 = arith.constant 0 : i32
    %c0_i32_0 = arith.constant 0 : i32
    %c0_i32_1 = arith.constant 0 : i32
    return %c0_i32, %c0_i32_0 : i32, i32
  }
}

</mosaic_0001>

<llo_original>
// kernel: tpu_custom_call.1
$region0: #{tpu_custom_call.1}
  #allocation0 [shape = 'u32[]', space=smem, size = 0x4, offset = 0x4, fixed_abs, tag = 'smem constant byte address 0x4 - core index']
  #allocation1 [shape = 'u32[144,128]{1,0:T(1,128)}', space=vmem, size = 0x12000, scoped, tag = 'internal scratch']
  #allocation2 [shape = 'f32[2,32]{1,0:T(2,128)}', space=vmem, size = 0x400, scoped, tag = 'scratch operand']
  %s0 = inlined_call_operand.hbm [shape: f32[2,32,256], index: 0, kind: input, shape index: {}]
  %s1 = inlined_call_operand.vmem [shape: f32[32,2], index: 1, kind: input, shape index: {}]
  %s2 = inlined_call_operand.vmem [shape: f32[2,32], index: 2, kind: input, shape index: {}]
  %s3 = inlined_call_operand.hbm [shape: f32[2,32], index: 3, kind: output, shape index: {}]
  %s4 = sld [smem:[#allocation0]]
  $region34: #{tpu_custom_call.1} parent=0
    _
  %s6 = ssub.s32 1, %s4
  %s7 = scalar_select 0, %s6, %s4
  $region1: #{tpu_custom_call.1} parent=0
    #allocation3 [shape = 'u8[65536]{0}', space=vmem, size = 0x10000, scoped, tag = 'input window, operand 0, single buffered']
    #allocation4 [shape = 's32[1]{0}', space=sflag, size = 0x4, scoped, tag = 'scoped memory for tpu_custom_call.1']
    #allocation5 [shape = 's32[1]{0}', space=sflag, size = 0x4, scoped, tag = 'scoped memory for tpu_custom_call.1']
    #allocation6 [shape = 'u8[1024]{0}', space=vmem, size = 0x400, scoped, tag = 'output window, operand 0, single buffered']
    %8 = vsyncpa [#allocation4], 0
    %9 = vsyncpa [#allocation5], 0
    // Predicated region
    $region2: #{tpu_custom_call.1} parent=1 // pred_check
      _
    $region3: #{tpu_custom_call.1} parent=1 // pred_check_branch
      %11 = sbr.rel (0) target = $region5
    $region4: #{tpu_custom_call.1} parent=1 // pred_region
      %s13 = ssub.s32 2048, 2048
      %14 = vsyncadd [#allocation4], %s13
      %s15 = sshll.u32 [#allocation3], 4
      %s16 = int_to_ptr.vmem [resolvable:$true] %s15
      %21 = dma.hbm_to_vmem [thread:$0]  %s0, 2048, %s16, [#allocation4], 256, 256, 16
    $region5: #{tpu_custom_call.1} parent=1 // pred_fallthru
      _
    // Predicated region
    $region6: #{tpu_custom_call.1} parent=1 // pred_check
      _
    $region7: #{tpu_custom_call.1} parent=1 // pred_check_branch
      %23 = sbr.rel (0) target = $region9
    $region8: #{tpu_custom_call.1} parent=1 // pred_region
      _
    $region9: #{tpu_custom_call.1} parent=1 // pred_fallthru
      _
    // Predicated region
    $region10: #{tpu_custom_call.1} parent=1 // pred_check
      _
    $region11: #{tpu_custom_call.1} parent=1 // pred_check_branch
      %25 = sbr.rel (0) target = $region13
    $region12: #{tpu_custom_call.1} parent=1 // pred_region
      _
    $region13: #{tpu_custom_call.1} parent=1 // pred_fallthru
      _
    // Predicated region
    $region14: #{tpu_custom_call.1} parent=1 // pred_check
      _
    $region15: #{tpu_custom_call.1} parent=1 // pred_check_branch
      %27 = sbr.rel (0) target = $region17
    $region16: #{tpu_custom_call.1} parent=1 // pred_region
      %28 = dma.done [#allocation4], 2048
    $region17: #{tpu_custom_call.1} parent=1 // pred_fallthru
      _
    %p29 = scmp.eq.s32.totalorder 0, 0
    // Predicated region
    $region18: #{tpu_custom_call.1} parent=1 // pred_check
      %p30 = pneg %p29
    $region19: #{tpu_custom_call.1} parent=1 // pred_check_branch
      %32 = sbr.rel (%p30) target = $region21
    $region20: #{tpu_custom_call.1} parent=1 // pred_region
      %vm33 = vcmask 254976
      %34 = vst.msk [vmem:[#allocation2] sm:$0x3] %vm33, 0.0
    $region21: #{tpu_custom_call.1} parent=1 // pred_fallthru
      _
    %v35 = vld [vmem:[#allocation2] sm:$0x3]
    %v36 = vld [vmem:[#allocation3] sm:$0xff]
    %v37 = vld [vmem:[#allocation3 + $0x8] sm:$0xff]
    %v38 = vld [vmem:[#allocation3 + $0x10] sm:$0xff]
    %v39 = vld [vmem:[#allocation3 + $0x18] sm:$0xff]
    %v40 = vld [vmem:[#allocation3 + $0x20] sm:$0xff]
    %v41 = vld [vmem:[#allocation3 + $0x28] sm:$0xff]
    %v42 = vld [vmem:[#allocation3 + $0x30] sm:$0xff]
    %v43 = vld [vmem:[#allocation3 + $0x38] sm:$0xff]
    %v44 = vld [vmem:[#allocation3 + $0x40] sm:$0xff]
    %v45 = vld [vmem:[#allocation3 + $0x48] sm:$0xff]
    %v46 = vld [vmem:[#allocation3 + $0x50] sm:$0xff]
    %v47 = vld [vmem:[#allocation3 + $0x58] sm:$0xff]
    %v48 = vld [vmem:[#allocation3 + $0x60] sm:$0xff]
    %v49 = vld [vmem:[#allocation3 + $0x68] sm:$0xff]
    %v50 = vld [vmem:[#allocation3 + $0x70] sm:$0xff]
    %v51 = vld [vmem:[#allocation3 + $0x78] sm:$0xff]
    %v52 = vadd.f32 %v36, %v37
    %53 = vadd.xlane.f32.xlu0 %v52
    %v54 = vpop.xlane.xlu0 %53
    %v55 = vadd.f32 %v38, %v39
    %56 = vadd.xlane.f32.xlu0 %v55
    %v57 = vpop.xlane.xlu0 %56
    %v58 = vadd.f32 %v40, %v41
    %59 = vadd.xlane.f32.xlu0 %v58
    %v60 = vpop.xlane.xlu0 %59
    %v61 = vadd.f32 %v42, %v43
    %62 = vadd.xlane.f32.xlu0 %v61
    %v63 = vpop.xlane.xlu0 %62
    %v64 = vadd.f32 %v44, %v45
    %65 = vadd.xlane.f32.xlu0 %v64
    %v66 = vpop.xlane.xlu0 %65
    %v67 = vadd.f32 %v46, %v47
    %68 = vadd.xlane.f32.xlu0 %v67
    %v69 = vpop.xlane.xlu0 %68
    %v70 = vadd.f32 %v48, %v49
    %71 = vadd.xlane.f32.xlu0 %v70
    %v72 = vpop.xlane.xlu0 %71
    %v73 = vadd.f32 %v50, %v51
    %74 = vadd.xlane.f32.xlu0 %v73
    %v75 = vpop.xlane.xlu0 %74
    %v84 = vlaneseq
    %v85 = vand.u32 %v84, 127
    %v86 = vlaneseq
    %v87 = vshrl.u32 %v86, 7
    %v88 = vsub.s32 %v85, %v87
    %v89 = vrot.slane %v54, %v88
    %v90 = vadd.s32 %v85, 4294967288
    %v91 = vlaneseq
    %v92 = vshrl.u32 %v91, 7
    %v93 = vsub.s32 %v90, %v92
    %v94 = vrot.slane %v57, %v93
    %vm95 = vcmask 130112
    %v96 = vsel %vm95, %v94, %v89
    %v97 = vadd.s32 %v85, 4294967280
    %v98 = vlaneseq
    %v99 = vshrl.u32 %v98, 7
    %v100 = vsub.s32 %v97, %v99
    %v101 = vrot.slane %v60, %v100
    %vm102 = vcmask 195712
    %v103 = vsel %vm102, %v101, %v96
    %v104 = vadd.s32 %v85, 4294967272
    %v105 = vlaneseq
    %v106 = vshrl.u32 %v105, 7
    %v107 = vsub.s32 %v104, %v106
    %v108 = vrot.slane %v63, %v107
    %vm109 = vcmask 261312
    %v110 = vsel %vm109, %v108, %v103
    %v111 = vlaneseq
    %v112 = vshrl.u32 %v111, 7
    %v113 = vsub.s32 %v85, %v112
    %v114 = vrot.slane %v66, %v113
    %v115 = vlaneseq
    %v116 = vshrl.u32 %v115, 7
    %v117 = vsub.s32 %v90, %v116
    %v118 = vrot.slane %v69, %v117
    %v119 = vsel %vm95, %v118, %v114
    %v120 = vlaneseq
    %v121 = vshrl.u32 %v120, 7
    %v122 = vsub.s32 %v97, %v121
    %v123 = vrot.slane %v72, %v122
    %v124 = vsel %vm102, %v123, %v119
    %v125 = vlaneseq
    %v126 = vshrl.u32 %v125, 7
    %v127 = vsub.s32 %v104, %v126
    %v128 = vrot.slane %v75, %v127
    %v129 = vsel %vm109, %v128, %v124
    %vm130 = vcmask 1041409
    %v131 = vsel %vm130, %v129, %v110
    %v133 = vadd.f32 %v35, %v131
    %vm134 = vcmask 254976
    %135 = vst.msk [vmem:[#allocation2] sm:$0x3] %vm134, %v133
    // Predicated region
    $region22: #{tpu_custom_call.1} parent=1 // pred_check
      %p136 = pneg %p29
    $region23: #{tpu_custom_call.1} parent=1 // pred_check_branch
      %138 = sbr.rel (%p136) target = $region25
    $region24: #{tpu_custom_call.1} parent=1 // pred_region
      %v139 = vld [vmem:[#allocation2] sm:$0x3]
      %v140 = vmul.f32 %v139, 0.00390625
      %v141 = vld [vmem:[%s1] sm:$0xff]
      %v142 = vld [vmem:[%s1 + $0x8] sm:$0xff]
      %v143 = vld [vmem:[%s1 + $0x10] sm:$0xff]
      %v144 = vld [vmem:[%s1 + $0x18] sm:$0xff]
      %vm145 = vcmask 261120
      %v147 = vsel %vm145, %v140, 0
      %149 = vmatprep.subr.mxu0 0.0
      %150 = vmatpush1.msra.mxu0 0.0
      %151 = vmatprep.subr.mxu0 0.0
      %152 = vmatpush1.msra.mxu0 0.0
      %153 = vmatprep.subr.mxu0 0.0
      %154 = vmatpush1.msra.mxu0 0.0
      %155 = vmatprep.subr.mxu0 0.0
      %156 = vmatpush1.msra.mxu0 0.0
      %157 = vmatprep.subr.mxu0 0.0
      %158 = vmatpush1.msra.mxu0 0.0
      %159 = vmatprep.subr.mxu0 0.0
      %160 = vmatpush1.msra.mxu0 0.0
      %161 = vmatprep.subr.mxu0 0.0
      %162 = vmatpush1.msra.mxu0 0.0
      %163 = vmatprep.subr.mxu0 0.0
      %164 = vmatpush1.msra.mxu0 0.0
      %165 = vmatprep.subr.mxu0 0.0
      %166 = vmatpush1.msra.mxu0 0.0
      %167 = vmatprep.subr.mxu0 0.0
      %168 = vmatpush1.msra.mxu0 0.0
      %169 = vmatprep.subr.mxu0 0.0
      %170 = vmatpush1.msra.mxu0 0.0
      %171 = vmatprep.subr.mxu0 0.0
      %172 = vmatpush1.msra.mxu0 0.0
      %173 = vmatprep.subr.mxu0 0.0
      %174 = vmatpush1.msra.mxu0 %v144
      %175 = vmatprep.subr.mxu0 0.0
      %176 = vmatpush1.msra.mxu0 %v143
      %177 = vmatprep.subr.mxu0 0.0
      %178 = vmatpush1.msra.mxu0 %v142
      %179 = vmatprep.subr.mxu0 0.0
      %180 = vmatpush1.msra.mxu0 %v141
      %181 = vmatprep.subr.mxu0 0.0
      %182 = vmatpush2.msra.mxu0 0.0
      %183 = vmatprep.subr.mxu0 0.0
      %184 = vmatpush2.msra.mxu0 0.0
      %185 = vmatprep.subr.mxu0 0.0
      %186 = vmatpush2.msra.mxu0 0.0
      %187 = vmatprep.subr.mxu0 0.0
      %188 = vmatpush2.msra.mxu0 0.0
      %189 = vmatprep.subr.mxu0 0.0
      %190 = vmatpush2.msra.mxu0 0.0
      %191 = vmatprep.subr.mxu0 0.0
      %192 = vmatpush2.msra.mxu0 0.0
      %193 = vmatprep.subr.mxu0 0.0
      %194 = vmatpush2.msra.mxu0 0.0
      %195 = vmatprep.subr.mxu0 0.0
      %196 = vmatpush2.msra.mxu0 0.0
      %197 = vmatprep.subr.mxu0 0.0
      %198 = vmatpush2.msra.mxu0 0.0
      %199 = vmatprep.subr.mxu0 0.0
      %200 = vmatpush2.msra.mxu0 0.0
      %201 = vmatprep.subr.mxu0 0.0
      %202 = vmatpush2.msra.mxu0 0.0
      %203 = vmatprep.subr.mxu0 0.0
      %204 = vmatpush2.msra.mxu0 0.0
      %205 = vmatprep.subr.mxu0 0.0
      %206 = vmatpush2.msra.mxu0 0.0
      %207 = vmatprep.subr.mxu0 0.0
      %208 = vmatpush2.msra.mxu0 0.0
      %209 = vmatprep.subr.mxu0 0.0
      %210 = vmatpush2.msra.mxu0 0.0
      %211 = vmatprep.subr.mxu0 0.0
      %212 = vmatpush2.msra.mxu0 0.0
      %213 = vmatprep.mubr.f32.mxu0 0.0
      %214 = vmatmul.mubr.f32.gmra.mxu0 %v147
      %v215 = vpop.f32.mrf.mxu0
      %v216 = vadd.f32 0.0, %v215
      %v217 = vpop.f32.mrf.mxu0
      %218 = vdwg.mxu0
      %v219 = vmax.f32 %v216, 0.0
      %v220 = vld [vmem:[%s2] sm:$0x3]
      %vm221 = vcmask 15360
      %v223 = vsel %vm221, %v219, 0
      %vm225 = vcmask 1041408
      %v227 = vsel %vm225, %v220, 0
      %229 = vmatprep.subr.mxu0 0.0
      %230 = vmatpush1.msra.mxu0 0.0
      %231 = vmatprep.subr.mxu0 0.0
      %232 = vmatpush1.msra.mxu0 0.0
      %233 = vmatprep.subr.mxu0 0.0
      %234 = vmatpush1.msra.mxu0 0.0
      %235 = vmatprep.subr.mxu0 0.0
      %236 = vmatpush1.msra.mxu0 0.0
      %237 = vmatprep.subr.mxu0 0.0
      %238 = vmatpush1.msra.mxu0 0.0
      %239 = vmatprep.subr.mxu0 0.0
      %240 = vmatpush1.msra.mxu0 0.0
      %241 = vmatprep.subr.mxu0 0.0
      %242 = vmatpush1.msra.mxu0 0.0
      %243 = vmatprep.subr.mxu0 0.0
      %244 = vmatpush1.msra.mxu0 0.0
      %245 = vmatprep.subr.mxu0 0.0
      %246 = vmatpush1.msra.mxu0 0.0
      %247 = vmatprep.subr.mxu0 0.0
      %248 = vmatpush1.msra.mxu0 0.0
      %249 = vmatprep.subr.mxu0 0.0
      %250 = vmatpush1.msra.mxu0 0.0
      %251 = vmatprep.subr.mxu0 0.0
      %252 = vmatpush1.msra.mxu0 0.0
      %253 = vmatprep.subr.mxu0 0.0
      %254 = vmatpush1.msra.mxu0 0.0
      %255 = vmatprep.subr.mxu0 0.0
      %256 = vmatpush1.msra.mxu0 0.0
      %257 = vmatprep.subr.mxu0 0.0
      %258 = vmatpush1.msra.mxu0 0.0
      %259 = vmatprep.subr.mxu0 0.0
      %260 = vmatpush1.msra.mxu0 %v227
      %261 = vmatprep.subr.mxu0 0.0
      %262 = vmatpush2.msra.mxu0 0.0
      %263 = vmatprep.subr.mxu0 0.0
      %264 = vmatpush2.msra.mxu0 0.0
      %265 = vmatprep.subr.mxu0 0.0
      %266 = vmatpush2.msra.mxu0 0.0
      %267 = vmatprep.subr.mxu0 0.0
      %268 = vmatpush2.msra.mxu0 0.0
      %269 = vmatprep.subr.mxu0 0.0
      %270 = vmatpush2.msra.mxu0 0.0
      %271 = vmatprep.subr.mxu0 0.0
      %272 = vmatpush2.msra.mxu0 0.0
      %273 = vmatprep.subr.mxu0 0.0
      %274 = vmatpush2.msra.mxu0 0.0
      %275 = vmatprep.subr.mxu0 0.0
      %276 = vmatpush2.msra.mxu0 0.0
      %277 = vmatprep.subr.mxu0 0.0
      %278 = vmatpush2.msra.mxu0 0.0
      %279 = vmatprep.subr.mxu0 0.0
      %280 = vmatpush2.msra.mxu0 0.0
      %281 = vmatprep.subr.mxu0 0.0
      %282 = vmatpush2.msra.mxu0 0.0
      %283 = vmatprep.subr.mxu0 0.0
      %284 = vmatpush2.msra.mxu0 0.0
      %285 = vmatprep.subr.mxu0 0.0
      %286 = vmatpush2.msra.mxu0 0.0
      %287 = vmatprep.subr.mxu0 0.0
      %288 = vmatpush2.msra.mxu0 0.0
      %289 = vmatprep.subr.mxu0 0.0
      %290 = vmatpush2.msra.mxu0 0.0
      %291 = vmatprep.subr.mxu0 0.0
      %292 = vmatpush2.msra.mxu0 0.0
      %293 = vmatprep.mubr.f32.mxu0 0.0
      %294 = vmatmul.mubr.f32.gmra.mxu0 %v223
      %v295 = vpop.f32.mrf.mxu0
      %v296 = vadd.f32 0.0, %v295
      %v297 = vpop.f32.mrf.mxu0
      %298 = vdwg.mxu0
      %v299 = vxor.u32 %v296, 2147483648
      %v300 = vmul.f32 %v299, 1.442695
      %v301 = vpow.pop %v300
      %v302 = vadd.f32 %v301, 1.0
      %v303 = vrcp.pop %v302
      %v304 = vmul.f32 1.0, %v303
      %305 = vst.msk [vmem:[#allocation6] sm:$0x3] %vm134, %v304
    $region25: #{tpu_custom_call.1} parent=1 // pred_fallthru
      _
    // Predicated region
    $region26: #{tpu_custom_call.1} parent=1 // pred_check
      _
    $region27: #{tpu_custom_call.1} parent=1 // pred_check_branch
      %307 = sbr.rel (0) target = $region29
    $region28: #{tpu_custom_call.1} parent=1 // pred_region
      %s309 = ssub.s32 32, 32
      %310 = vsyncadd [#allocation5], %s309
      %s312 = sshll.u32 [#allocation6], 4
      %s313 = int_to_ptr.vmem [resolvable:$true] %s312
      %315 = dma.vmem_to_hbm [thread:$0]  %s313, 32, %s3, [#allocation5]
    $region29: #{tpu_custom_call.1} parent=1 // pred_fallthru
      _
    // Predicated region
    $region30: #{tpu_custom_call.1} parent=1 // pred_check
      _
    $region31: #{tpu_custom_call.1} parent=1 // pred_check_branch
      %317 = sbr.rel (0) target = $region33
    $region32: #{tpu_custom_call.1} parent=1 // pred_region
      %318 = dma.done [#allocation5], 32
    $region33: #{tpu_custom_call.1} parent=1 // pred_fallthru
      _
    %319 = vsyncpa [#allocation4], 1
    %320 = vsyncpa [#allocation5], 1

</llo_original>
